<compile_context>
chip_gen: v7x
topology: tpu7x:2x2x1
jax: 0.10.0
libtpu: 0.0.40
codegen_flags: <defaults>
</compile_context>

<pallas_src>
import functools

import jax
import jax.numpy as jnp
from jax.experimental import pallas as pl
from jax.experimental.pallas import tpu as pltpu


def _fm_kernel_reduce(x_ref, o_ref, *, num_fields, embed_dim):
    # x_ref: (bb, F*D) input tile; o_ref: (1, bb) lane-dense output tile.
    D = embed_dim
    bb = x_ref.shape[0]
    s = jnp.zeros((bb, D), jnp.float32)          # sum over fields
    ssum = jnp.zeros((bb,), jnp.float32)         # sum over fields+dim of x^2
    for f in range(num_fields):                  # static unroll (F is small)
        xf = x_ref[:, f * D:(f + 1) * D].astype(jnp.float32)  # stream per field
        s = s + xf
        ssum = ssum + jnp.sum(xf * xf, axis=1)   # XLU reduce, hidden under DMA
    row = 0.5 * (jnp.sum(s * s, axis=1) - ssum)  # (bb,)
    o_ref[...] = row[None, :].astype(o_ref.dtype)  # (1, bb) lane-dense store


def _fm_kernel_noreduce(x_ref, o_ref, *, num_fields, embed_dim):
    # x_ref: (bb, F*D) input tile; o_ref: (bb, D) output tile.
    D = embed_dim
    bb = x_ref.shape[0]
    s = jnp.zeros((bb, D), jnp.float32)
    ss = jnp.zeros((bb, D), jnp.float32)
    for f in range(num_fields):
        xf = x_ref[:, f * D:(f + 1) * D].astype(jnp.float32)
        s = s + xf
        ss = ss + xf * xf
    o_ref[...] = (0.5 * (s * s - ss)).astype(o_ref.dtype)


def _default_block_batch(B, F, D, itemsize):
    """Target ~8 MiB of HBM-side input bytes per grid step (dtype-aware)."""
    bytes_per_row = max(F * D * itemsize, 1)
    target_bytes = 8 * 1024 * 1024
    bb = target_bytes // bytes_per_row
    # Also cap the f32 working-set footprint (~12 MiB per buffer-equivalent)
    # so accumulators / cast slices never blow the scoped-VMEM budget.
    bb = min(bb, (12 * 1024 * 1024) // max(F * D * 4, 1))
    bb = max(128, min(bb, 16384))
    return (bb // 128) * 128


def _sanitize_block_batch(bb, B):
    rows = pl.cdiv(B, 128) * 128
    bb = max(128, (int(bb) // 128) * 128)
    # Guarantee >= 4 grid steps when the batch allows it (software pipelining
    # on all generations; megacore sharding of the batch axis on v7x).
    if rows >= 4 * 128:
        bb = min(bb, max(128, ((rows // 4) // 128) * 128))
    return min(bb, rows)


@functools.partial(jax.jit, static_argnames=("reduce_sum", "block_batch"))
def factorization_machine(x, *, reduce_sum=True, block_batch=None):
    """FM pairwise-interaction forward pass.

    x: (B, F, D) float32 / bfloat16
    returns (B, 1) if reduce_sum else (B, D)
    """
    B, F, D = x.shape
    itemsize = jnp.dtype(x.dtype).itemsize
    if block_batch is None:
        block_batch = _default_block_batch(B, F, D, itemsize)
    block_batch = _sanitize_block_batch(block_batch, B)

    n_blocks = pl.cdiv(B, block_batch)           # partial last block is fine
    x2 = x.reshape(B, F * D)                     # zero-cost, lane-dense; NO pad

    in_spec = pl.BlockSpec((block_batch, F * D), lambda i: (i, 0))

    out_elems = B * (1 if reduce_sum else D)
    cost = pl.CostEstimate(
        flops=4 * B * F * D,
        transcendentals=0,
        bytes_accessed=B * F * D * itemsize + out_elems * itemsize,
    )

    if reduce_sum:
        kernel = functools.partial(_fm_kernel_reduce, num_fields=F, embed_dim=D)
        out_shape = jax.ShapeDtypeStruct((1, B), x.dtype)
        out_spec = pl.BlockSpec((1, block_batch), lambda i: (0, i))
    else:
        kernel = functools.partial(_fm_kernel_noreduce, num_fields=F, embed_dim=D)
        out_shape = jax.ShapeDtypeStruct((B, D), x.dtype)
        out_spec = pl.BlockSpec((block_batch, D), lambda i: (i, 0))

    out = pl.pallas_call(
        kernel,
        out_shape=out_shape,
        grid_spec=pltpu.PrefetchScalarGridSpec(
            num_scalar_prefetch=0,
            grid=(n_blocks,),
            in_specs=[in_spec],
            out_specs=out_spec,
        ),
        compiler_params=pltpu.CompilerParams(
            dimension_semantics=("parallel",),
            vmem_limit_bytes=48 * 1024 * 1024,   # 2x8 MiB in-bufs + f32 temps, < v7x 64 MiB
        ),
        cost_estimate=cost,
    )(x2)

    if reduce_sum:
        return out.reshape(B, 1)                 # (1, B) -> (B, 1): free row-major reshape
    return out


def _reference(x, reduce_sum=True):
    xf = x.astype(jnp.float32)
    square_of_sum = jnp.sum(xf, axis=1) ** 2
    sum_of_square = jnp.sum(xf ** 2, axis=1)
    ix = square_of_sum - sum_of_square
    if reduce_sum:
        ix = jnp.sum(ix, axis=1, keepdims=True)
    return 0.5 * ix


if __name__ == "__main__":
    key = jax.random.PRNGKey(0)

    # --- Small shape from the module docstring: (batch, num_fields, embed_dim)
    B, F, D = 8, 4, 32
    x = jax.random.normal(key, (B, F, D), dtype=jnp.float32)

    out = jax.block_until_ready(factorization_machine(x, reduce_sum=True))
    ref = _reference(x, reduce_sum=True)
    assert out.shape == (B, 1), out.shape
    assert jnp.allclose(out, ref, atol=1e-5, rtol=1e-5)

    out2 = jax.block_until_ready(factorization_machine(x, reduce_sum=False))
    ref2 = _reference(x, reduce_sum=False)
    assert out2.shape == (B, D), out2.shape
    assert jnp.allclose(out2, ref2, atol=1e-5, rtol=1e-5)

    # --- Ragged multi-block batch (exercises the partial last block that
    #     replaced the old jnp.pad copy) with an explicit small block size.
    B2 = 300
    x3 = jax.random.normal(jax.random.PRNGKey(1), (B2, F, D), dtype=jnp.float32)
    out3 = jax.block_until_ready(
        factorization_machine(x3, reduce_sum=True, block_batch=128))
    ref3 = _reference(x3, reduce_sum=True)
    assert out3.shape == (B2, 1), out3.shape
    assert jnp.allclose(out3, ref3, atol=1e-4, rtol=1e-4)

    # --- bf16 input path (per-field load + f32 accumulation inside the kernel)
    x4 = x3.astype(jnp.bfloat16)
    out4 = jax.block_until_ready(
        factorization_machine(x4, reduce_sum=True, block_batch=128))
    ref4 = _reference(x4, reduce_sum=True)
    assert jnp.allclose(out4.astype(jnp.float32), ref4, atol=5e-2, rtol=2e-2)

    print("KERNEL_OK")
</pallas_src>

<mosaic_0001>
module attributes {stable_mosaic.version = 11 : i64} {
  func.func @_fm_kernel_reduce(%arg0: i32, %arg1: memref<128x128xf32, #tpu.memory_space<vmem>>, %arg2: memref<1x128xf32, #tpu.memory_space<vmem>>) attributes {dimension_semantics = [#tpu.dimension_semantics<parallel>], iteration_bounds = array<i64: 1>, scalar_prefetch = 0 : i64, scratch_operands = 0 : i64, tpu.core_type = #tpu.core_type<tc>, window_params = [{transform_indices = @transform_0, window_bounds = array<i64: 128, 128>}, {transform_indices = @transform_1, window_bounds = array<i64: 1, 128>}]} {
    %cst = arith.constant 0.000000e+00 : f32
    %0 = vector.broadcast %cst : f32 to vector<128x32xf32>
    %cst_0 = arith.constant 0.000000e+00 : f32
    %1 = vector.broadcast %cst_0 : f32 to vector<128xf32>
    %c0 = arith.constant 0 : index
    %c0_1 = arith.constant 0 : index
    %2 = vector.load %arg1[%c0, %c0_1] : memref<128x128xf32, #tpu.memory_space<vmem>>, vector<128x32xf32>
    %3 = arith.addf %0, %2 : vector<128x32xf32>
    %4 = arith.mulf %2, %2 : vector<128x32xf32>
    %cst_2 = arith.constant dense<0.000000e+00> : vector<128xf32>
    %5 = vector.multi_reduction <add>, %4, %cst_2 [1] : vector<128x32xf32> to vector<128xf32>
    %6 = arith.addf %1, %5 : vector<128xf32>
    %c0_3 = arith.constant 0 : index
    %c32 = arith.constant 32 : index
    %7 = vector.load %arg1[%c0_3, %c32] : memref<128x128xf32, #tpu.memory_space<vmem>>, vector<128x32xf32>
    %8 = arith.addf %3, %7 : vector<128x32xf32>
    %9 = arith.mulf %7, %7 : vector<128x32xf32>
    %cst_4 = arith.constant dense<0.000000e+00> : vector<128xf32>
    %10 = vector.multi_reduction <add>, %9, %cst_4 [1] : vector<128x32xf32> to vector<128xf32>
    %11 = arith.addf %6, %10 : vector<128xf32>
    %c0_5 = arith.constant 0 : index
    %c64 = arith.constant 64 : index
    %12 = vector.load %arg1[%c0_5, %c64] : memref<128x128xf32, #tpu.memory_space<vmem>>, vector<128x32xf32>
    %13 = arith.addf %8, %12 : vector<128x32xf32>
    %14 = arith.mulf %12, %12 : vector<128x32xf32>
    %cst_6 = arith.constant dense<0.000000e+00> : vector<128xf32>
    %15 = vector.multi_reduction <add>, %14, %cst_6 [1] : vector<128x32xf32> to vector<128xf32>
    %16 = arith.addf %11, %15 : vector<128xf32>
    %c0_7 = arith.constant 0 : index
    %c96 = arith.constant 96 : index
    %17 = vector.load %arg1[%c0_7, %c96] : memref<128x128xf32, #tpu.memory_space<vmem>>, vector<128x32xf32>
    %18 = arith.addf %13, %17 : vector<128x32xf32>
    %19 = arith.mulf %17, %17 : vector<128x32xf32>
    %cst_8 = arith.constant dense<0.000000e+00> : vector<128xf32>
    %20 = vector.multi_reduction <add>, %19, %cst_8 [1] : vector<128x32xf32> to vector<128xf32>
    %21 = arith.addf %16, %20 : vector<128xf32>
    %22 = arith.mulf %18, %18 : vector<128x32xf32>
    %cst_9 = arith.constant dense<0.000000e+00> : vector<128xf32>
    %23 = vector.multi_reduction <add>, %22, %cst_9 [1] : vector<128x32xf32> to vector<128xf32>
    %24 = arith.subf %23, %21 : vector<128xf32>
    %cst_10 = arith.constant 5.000000e-01 : f32
    %25 = vector.broadcast %cst_10 : f32 to vector<128xf32>
    %26 = arith.mulf %25, %24 : vector<128xf32>
    %27 = vector.shape_cast %26 : vector<128xf32> to vector<1x128xf32>
    %c0_11 = arith.constant 0 : index
    %c0_12 = arith.constant 0 : index
    %28 = vector.load %arg2[%c0_11, %c0_12] : memref<1x128xf32, #tpu.memory_space<vmem>>, vector<1x128xf32>
    tpu.vector_store %arg2[%c0_11, %c0_12], %27 {strides = array<i32>} : memref<1x128xf32, #tpu.memory_space<vmem>>, vector<1x128xf32>,
    return
  }
  func.func @transform_0(%arg0: i32) -> (i32, i32) {
    %c0_i32 = arith.constant 0 : i32
    %c0_i32_0 = arith.constant 0 : i32
    return %arg0, %c0_i32 : i32, i32
  }
  func.func @transform_1(%arg0: i32) -> (i32, i32) {
    %c0_i32 = arith.constant 0 : i32
    %c0_i32_0 = arith.constant 0 : i32
    return %c0_i32, %arg0 : i32, i32
  }
}

</mosaic_0001>

<llo_original>
// kernel: factorization_machine.1
$region0: #{factorization_machine.1}
  #allocation0 [shape = 'u32[]', space=smem, size = 0x4, offset = 0x4, fixed_abs, tag = 'smem constant byte address 0x4 - core index']
  #allocation1 [shape = 'u32[144,128]{1,0:T(1,128)}', space=vmem, size = 0x12000, scoped, tag = 'internal scratch']
  %s0 = inlined_call_operand.vmem [shape: f32[8,128], index: 0, kind: input, shape index: {}]
  %s1 = inlined_call_operand.hbm [shape: f32[1,8], index: 1, kind: output, shape index: {}]
  %s2 = sld [smem:[#allocation0]]
  $region14: #{factorization_machine.1} parent=0
    _
  %s4 = ssub.s32 1, %s2
  %s5 = scalar_select 0, %s4, %s2
  $region1: #{factorization_machine.1} parent=0
    #allocation2 [shape = 'u8[512]{0}', space=vmem, size = 0x400, scoped, tag = 'output window, operand 0, single buffered']
    #allocation3 [shape = 's32[1]{0}', space=sflag, size = 0x4, scoped, tag = 'scoped memory for factorization_machine.1']
    %6 = vsyncpa [#allocation3], 0
    // Predicated region
    $region2: #{factorization_machine.1} parent=1 // pred_check
      _
    $region3: #{factorization_machine.1} parent=1 // pred_check_branch
      %8 = sbr.rel (0) target = $region5
    $region4: #{factorization_machine.1} parent=1 // pred_region
      _
    $region5: #{factorization_machine.1} parent=1 // pred_fallthru
      _
    %v9 = vld [vmem:[%s0] sm:$0xff]
    %v10 = vld [vmem:[%s0 + $0x8] sm:$0xff]
    %v11 = vld [vmem:[%s0 + $0x10] sm:$0xff]
    %v12 = vld [vmem:[%s0 + $0x18] sm:$0xff]
    %v13 = vld [vmem:[%s0 + $0x20] sm:$0xff]
    %v14 = vld [vmem:[%s0 + $0x28] sm:$0xff]
    %v15 = vld [vmem:[%s0 + $0x30] sm:$0xff]
    %v16 = vld [vmem:[%s0 + $0x38] sm:$0xff]
    %v17 = vld [vmem:[%s0 + $0x40] sm:$0xff]
    %v18 = vld [vmem:[%s0 + $0x48] sm:$0xff]
    %v19 = vld [vmem:[%s0 + $0x50] sm:$0xff]
    %v20 = vld [vmem:[%s0 + $0x58] sm:$0xff]
    %v21 = vld [vmem:[%s0 + $0x60] sm:$0xff]
    %v22 = vld [vmem:[%s0 + $0x68] sm:$0xff]
    %v23 = vld [vmem:[%s0 + $0x70] sm:$0xff]
    %v24 = vld [vmem:[%s0 + $0x78] sm:$0xff]
    %v25 = vadd.f32 %v9, 0.0
    %v26 = vadd.f32 %v10, 0.0
    %v27 = vadd.f32 %v11, 0.0
    %v28 = vadd.f32 %v12, 0.0
    %v29 = vadd.f32 %v13, 0.0
    %v30 = vadd.f32 %v14, 0.0
    %v31 = vadd.f32 %v15, 0.0
    %v32 = vadd.f32 %v16, 0.0
    %v33 = vadd.f32 %v17, 0.0
    %v34 = vadd.f32 %v18, 0.0
    %v35 = vadd.f32 %v19, 0.0
    %v36 = vadd.f32 %v20, 0.0
    %v37 = vadd.f32 %v21, 0.0
    %v38 = vadd.f32 %v22, 0.0
    %v39 = vadd.f32 %v23, 0.0
    %v40 = vadd.f32 %v24, 0.0
    %v41 = vmul.f32 %v9, %v9
    %v42 = vmul.f32 %v10, %v10
    %v43 = vmul.f32 %v11, %v11
    %v44 = vmul.f32 %v12, %v12
    %v45 = vmul.f32 %v13, %v13
    %v46 = vmul.f32 %v14, %v14
    %v47 = vmul.f32 %v15, %v15
    %v48 = vmul.f32 %v16, %v16
    %v49 = vmul.f32 %v17, %v17
    %v50 = vmul.f32 %v18, %v18
    %v51 = vmul.f32 %v19, %v19
    %v52 = vmul.f32 %v20, %v20
    %v53 = vmul.f32 %v21, %v21
    %v54 = vmul.f32 %v22, %v22
    %v55 = vmul.f32 %v23, %v23
    %v56 = vmul.f32 %v24, %v24
    %vm57 = vcmask 261120
    %v58 = vsel %vm57, %v41, 0.0
    %59 = vadd.xlane.f32.xlu0 %v58
    %v60 = vpop.xlane.xlu0 %59
    %v61 = vsel %vm57, %v42, 0.0
    %62 = vadd.xlane.f32.xlu0 %v61
    %v63 = vpop.xlane.xlu0 %62
    %v64 = vsel %vm57, %v43, 0.0
    %65 = vadd.xlane.f32.xlu0 %v64
    %v66 = vpop.xlane.xlu0 %65
    %v67 = vsel %vm57, %v44, 0.0
    %68 = vadd.xlane.f32.xlu0 %v67
    %v69 = vpop.xlane.xlu0 %68
    %v70 = vsel %vm57, %v45, 0.0
    %71 = vadd.xlane.f32.xlu0 %v70
    %v72 = vpop.xlane.xlu0 %71
    %v73 = vsel %vm57, %v46, 0.0
    %74 = vadd.xlane.f32.xlu0 %v73
    %v75 = vpop.xlane.xlu0 %74
    %v76 = vsel %vm57, %v47, 0.0
    %77 = vadd.xlane.f32.xlu0 %v76
    %v78 = vpop.xlane.xlu0 %77
    %v79 = vsel %vm57, %v48, 0.0
    %80 = vadd.xlane.f32.xlu0 %v79
    %v81 = vpop.xlane.xlu0 %80
    %v82 = vsel %vm57, %v49, 0.0
    %83 = vadd.xlane.f32.xlu0 %v82
    %v84 = vpop.xlane.xlu0 %83
    %v85 = vsel %vm57, %v50, 0.0
    %86 = vadd.xlane.f32.xlu0 %v85
    %v87 = vpop.xlane.xlu0 %86
    %v88 = vsel %vm57, %v51, 0.0
    %89 = vadd.xlane.f32.xlu0 %v88
    %v90 = vpop.xlane.xlu0 %89
    %v91 = vsel %vm57, %v52, 0.0
    %92 = vadd.xlane.f32.xlu0 %v91
    %v93 = vpop.xlane.xlu0 %92
    %v94 = vsel %vm57, %v53, 0.0
    %95 = vadd.xlane.f32.xlu0 %v94
    %v96 = vpop.xlane.xlu0 %95
    %v97 = vsel %vm57, %v54, 0.0
    %98 = vadd.xlane.f32.xlu0 %v97
    %v99 = vpop.xlane.xlu0 %98
    %v100 = vsel %vm57, %v55, 0.0
    %101 = vadd.xlane.f32.xlu0 %v100
    %v102 = vpop.xlane.xlu0 %101
    %v103 = vsel %vm57, %v56, 0.0
    %104 = vadd.xlane.f32.xlu0 %v103
    %v105 = vpop.xlane.xlu0 %104
    %v106 = vadd.f32 %v60, 0.0
    %v107 = vadd.f32 %v63, 0.0
    %v108 = vadd.f32 %v66, 0.0
    %v109 = vadd.f32 %v69, 0.0
    %v110 = vadd.f32 %v72, 0.0
    %v111 = vadd.f32 %v75, 0.0
    %v112 = vadd.f32 %v78, 0.0
    %v113 = vadd.f32 %v81, 0.0
    %v114 = vadd.f32 %v84, 0.0
    %v115 = vadd.f32 %v87, 0.0
    %v116 = vadd.f32 %v90, 0.0
    %v117 = vadd.f32 %v93, 0.0
    %v118 = vadd.f32 %v96, 0.0
    %v119 = vadd.f32 %v99, 0.0
    %v120 = vadd.f32 %v102, 0.0
    %v121 = vadd.f32 %v105, 0.0
    %138 = vrot.lane.b32.xlu0 %v9, 96
    %v139 = vpop.permute.xlu0 %138
    %140 = vrot.lane.b32.xlu0 %v10, 96
    %v141 = vpop.permute.xlu0 %140
    %142 = vrot.lane.b32.xlu0 %v11, 96
    %v143 = vpop.permute.xlu0 %142
    %144 = vrot.lane.b32.xlu0 %v12, 96
    %v145 = vpop.permute.xlu0 %144
    %146 = vrot.lane.b32.xlu0 %v13, 96
    %v147 = vpop.permute.xlu0 %146
    %148 = vrot.lane.b32.xlu0 %v14, 96
    %v149 = vpop.permute.xlu0 %148
    %150 = vrot.lane.b32.xlu0 %v15, 96
    %v151 = vpop.permute.xlu0 %150
    %152 = vrot.lane.b32.xlu0 %v16, 96
    %v153 = vpop.permute.xlu0 %152
    %154 = vrot.lane.b32.xlu0 %v17, 96
    %v155 = vpop.permute.xlu0 %154
    %156 = vrot.lane.b32.xlu0 %v18, 96
    %v157 = vpop.permute.xlu0 %156
    %158 = vrot.lane.b32.xlu0 %v19, 96
    %v159 = vpop.permute.xlu0 %158
    %160 = vrot.lane.b32.xlu0 %v20, 96
    %v161 = vpop.permute.xlu0 %160
    %162 = vrot.lane.b32.xlu0 %v21, 96
    %v163 = vpop.permute.xlu0 %162
    %164 = vrot.lane.b32.xlu0 %v22, 96
    %v165 = vpop.permute.xlu0 %164
    %166 = vrot.lane.b32.xlu0 %v23, 96
    %v167 = vpop.permute.xlu0 %166
    %168 = vrot.lane.b32.xlu0 %v24, 96
    %v169 = vpop.permute.xlu0 %168
    %v186 = vadd.f32 %v25, %v139
    %v187 = vadd.f32 %v26, %v141
    %v188 = vadd.f32 %v27, %v143
    %v189 = vadd.f32 %v28, %v145
    %v190 = vadd.f32 %v29, %v147
    %v191 = vadd.f32 %v30, %v149
    %v192 = vadd.f32 %v31, %v151
    %v193 = vadd.f32 %v32, %v153
    %v194 = vadd.f32 %v33, %v155
    %v195 = vadd.f32 %v34, %v157
    %v196 = vadd.f32 %v35, %v159
    %v197 = vadd.f32 %v36, %v161
    %v198 = vadd.f32 %v37, %v163
    %v199 = vadd.f32 %v38, %v165
    %v200 = vadd.f32 %v39, %v167
    %v201 = vadd.f32 %v40, %v169
    %218 = vrot.lane.b32.xlu0 %v41, 96
    %v219 = vpop.permute.xlu0 %218
    %220 = vrot.lane.b32.xlu0 %v42, 96
    %v221 = vpop.permute.xlu0 %220
    %222 = vrot.lane.b32.xlu0 %v43, 96
    %v223 = vpop.permute.xlu0 %222
    %224 = vrot.lane.b32.xlu0 %v44, 96
    %v225 = vpop.permute.xlu0 %224
    %226 = vrot.lane.b32.xlu0 %v45, 96
    %v227 = vpop.permute.xlu0 %226
    %228 = vrot.lane.b32.xlu0 %v46, 96
    %v229 = vpop.permute.xlu0 %228
    %230 = vrot.lane.b32.xlu0 %v47, 96
    %v231 = vpop.permute.xlu0 %230
    %232 = vrot.lane.b32.xlu0 %v48, 96
    %v233 = vpop.permute.xlu0 %232
    %234 = vrot.lane.b32.xlu0 %v49, 96
    %v235 = vpop.permute.xlu0 %234
    %236 = vrot.lane.b32.xlu0 %v50, 96
    %v237 = vpop.permute.xlu0 %236
    %238 = vrot.lane.b32.xlu0 %v51, 96
    %v239 = vpop.permute.xlu0 %238
    %240 = vrot.lane.b32.xlu0 %v52, 96
    %v241 = vpop.permute.xlu0 %240
    %242 = vrot.lane.b32.xlu0 %v53, 96
    %v243 = vpop.permute.xlu0 %242
    %244 = vrot.lane.b32.xlu0 %v54, 96
    %v245 = vpop.permute.xlu0 %244
    %246 = vrot.lane.b32.xlu0 %v55, 96
    %v247 = vpop.permute.xlu0 %246
    %248 = vrot.lane.b32.xlu0 %v56, 96
    %v249 = vpop.permute.xlu0 %248
    %v266 = vsel %vm57, %v219, 0.0
    %267 = vadd.xlane.f32.xlu0 %v266
    %v268 = vpop.xlane.xlu0 %267
    %v269 = vsel %vm57, %v221, 0.0
    %270 = vadd.xlane.f32.xlu0 %v269
    %v271 = vpop.xlane.xlu0 %270
    %v272 = vsel %vm57, %v223, 0.0
    %273 = vadd.xlane.f32.xlu0 %v272
    %v274 = vpop.xlane.xlu0 %273
    %v275 = vsel %vm57, %v225, 0.0
    %276 = vadd.xlane.f32.xlu0 %v275
    %v277 = vpop.xlane.xlu0 %276
    %v278 = vsel %vm57, %v227, 0.0
    %279 = vadd.xlane.f32.xlu0 %v278
    %v280 = vpop.xlane.xlu0 %279
    %v281 = vsel %vm57, %v229, 0.0
    %282 = vadd.xlane.f32.xlu0 %v281
    %v283 = vpop.xlane.xlu0 %282
    %v284 = vsel %vm57, %v231, 0.0
    %285 = vadd.xlane.f32.xlu0 %v284
    %v286 = vpop.xlane.xlu0 %285
    %v287 = vsel %vm57, %v233, 0.0
    %288 = vadd.xlane.f32.xlu0 %v287
    %v289 = vpop.xlane.xlu0 %288
    %v290 = vsel %vm57, %v235, 0.0
    %291 = vadd.xlane.f32.xlu0 %v290
    %v292 = vpop.xlane.xlu0 %291
    %v293 = vsel %vm57, %v237, 0.0
    %294 = vadd.xlane.f32.xlu0 %v293
    %v295 = vpop.xlane.xlu0 %294
    %v296 = vsel %vm57, %v239, 0.0
    %297 = vadd.xlane.f32.xlu0 %v296
    %v298 = vpop.xlane.xlu0 %297
    %v299 = vsel %vm57, %v241, 0.0
    %300 = vadd.xlane.f32.xlu0 %v299
    %v301 = vpop.xlane.xlu0 %300
    %v302 = vsel %vm57, %v243, 0.0
    %303 = vadd.xlane.f32.xlu0 %v302
    %v304 = vpop.xlane.xlu0 %303
    %v305 = vsel %vm57, %v245, 0.0
    %306 = vadd.xlane.f32.xlu0 %v305
    %v307 = vpop.xlane.xlu0 %306
    %v308 = vsel %vm57, %v247, 0.0
    %309 = vadd.xlane.f32.xlu0 %v308
    %v310 = vpop.xlane.xlu0 %309
    %v311 = vsel %vm57, %v249, 0.0
    %312 = vadd.xlane.f32.xlu0 %v311
    %v313 = vpop.xlane.xlu0 %312
    %v314 = vadd.f32 %v106, %v268
    %v315 = vadd.f32 %v107, %v271
    %v316 = vadd.f32 %v108, %v274
    %v317 = vadd.f32 %v109, %v277
    %v318 = vadd.f32 %v110, %v280
    %v319 = vadd.f32 %v111, %v283
    %v320 = vadd.f32 %v112, %v286
    %v321 = vadd.f32 %v113, %v289
    %v322 = vadd.f32 %v114, %v292
    %v323 = vadd.f32 %v115, %v295
    %v324 = vadd.f32 %v116, %v298
    %v325 = vadd.f32 %v117, %v301
    %v326 = vadd.f32 %v118, %v304
    %v327 = vadd.f32 %v119, %v307
    %v328 = vadd.f32 %v120, %v310
    %v329 = vadd.f32 %v121, %v313
    %330 = vrot.lane.b32.xlu0 %v9, 64
    %v331 = vpop.permute.xlu0 %330
    %332 = vrot.lane.b32.xlu0 %v10, 64
    %v333 = vpop.permute.xlu0 %332
    %334 = vrot.lane.b32.xlu0 %v11, 64
    %v335 = vpop.permute.xlu0 %334
    %336 = vrot.lane.b32.xlu0 %v12, 64
    %v337 = vpop.permute.xlu0 %336
    %338 = vrot.lane.b32.xlu0 %v13, 64
    %v339 = vpop.permute.xlu0 %338
    %340 = vrot.lane.b32.xlu0 %v14, 64
    %v341 = vpop.permute.xlu0 %340
    %342 = vrot.lane.b32.xlu0 %v15, 64
    %v343 = vpop.permute.xlu0 %342
    %344 = vrot.lane.b32.xlu0 %v16, 64
    %v345 = vpop.permute.xlu0 %344
    %346 = vrot.lane.b32.xlu0 %v17, 64
    %v347 = vpop.permute.xlu0 %346
    %348 = vrot.lane.b32.xlu0 %v18, 64
    %v349 = vpop.permute.xlu0 %348
    %350 = vrot.lane.b32.xlu0 %v19, 64
    %v351 = vpop.permute.xlu0 %350
    %352 = vrot.lane.b32.xlu0 %v20, 64
    %v353 = vpop.permute.xlu0 %352
    %354 = vrot.lane.b32.xlu0 %v21, 64
    %v355 = vpop.permute.xlu0 %354
    %356 = vrot.lane.b32.xlu0 %v22, 64
    %v357 = vpop.permute.xlu0 %356
    %358 = vrot.lane.b32.xlu0 %v23, 64
    %v359 = vpop.permute.xlu0 %358
    %360 = vrot.lane.b32.xlu0 %v24, 64
    %v361 = vpop.permute.xlu0 %360
    %v378 = vadd.f32 %v186, %v331
    %v379 = vadd.f32 %v187, %v333
    %v380 = vadd.f32 %v188, %v335
    %v381 = vadd.f32 %v189, %v337
    %v382 = vadd.f32 %v190, %v339
    %v383 = vadd.f32 %v191, %v341
    %v384 = vadd.f32 %v192, %v343
    %v385 = vadd.f32 %v193, %v345
    %v386 = vadd.f32 %v194, %v347
    %v387 = vadd.f32 %v195, %v349
    %v388 = vadd.f32 %v196, %v351
    %v389 = vadd.f32 %v197, %v353
    %v390 = vadd.f32 %v198, %v355
    %v391 = vadd.f32 %v199, %v357
    %v392 = vadd.f32 %v200, %v359
    %v393 = vadd.f32 %v201, %v361
    %394 = vrot.lane.b32.xlu0 %v41, 64
    %v395 = vpop.permute.xlu0 %394
    %396 = vrot.lane.b32.xlu0 %v42, 64
    %v397 = vpop.permute.xlu0 %396
    %398 = vrot.lane.b32.xlu0 %v43, 64
    %v399 = vpop.permute.xlu0 %398
    %400 = vrot.lane.b32.xlu0 %v44, 64
    %v401 = vpop.permute.xlu0 %400
    %402 = vrot.lane.b32.xlu0 %v45, 64
    %v403 = vpop.permute.xlu0 %402
    %404 = vrot.lane.b32.xlu0 %v46, 64
    %v405 = vpop.permute.xlu0 %404
    %406 = vrot.lane.b32.xlu0 %v47, 64
    %v407 = vpop.permute.xlu0 %406
    %408 = vrot.lane.b32.xlu0 %v48, 64
    %v409 = vpop.permute.xlu0 %408
    %410 = vrot.lane.b32.xlu0 %v49, 64
    %v411 = vpop.permute.xlu0 %410
    %412 = vrot.lane.b32.xlu0 %v50, 64
    %v413 = vpop.permute.xlu0 %412
    %414 = vrot.lane.b32.xlu0 %v51, 64
    %v415 = vpop.permute.xlu0 %414
    %416 = vrot.lane.b32.xlu0 %v52, 64
    %v417 = vpop.permute.xlu0 %416
    %418 = vrot.lane.b32.xlu0 %v53, 64
    %v419 = vpop.permute.xlu0 %418
    %420 = vrot.lane.b32.xlu0 %v54, 64
    %v421 = vpop.permute.xlu0 %420
    %422 = vrot.lane.b32.xlu0 %v55, 64
    %v423 = vpop.permute.xlu0 %422
    %424 = vrot.lane.b32.xlu0 %v56, 64
    %v425 = vpop.permute.xlu0 %424
    %v442 = vsel %vm57, %v395, 0.0
    %443 = vadd.xlane.f32.xlu0 %v442
    %v444 = vpop.xlane.xlu0 %443
    %v445 = vsel %vm57, %v397, 0.0
    %446 = vadd.xlane.f32.xlu0 %v445
    %v447 = vpop.xlane.xlu0 %446
    %v448 = vsel %vm57, %v399, 0.0
    %449 = vadd.xlane.f32.xlu0 %v448
    %v450 = vpop.xlane.xlu0 %449
    %v451 = vsel %vm57, %v401, 0.0
    %452 = vadd.xlane.f32.xlu0 %v451
    %v453 = vpop.xlane.xlu0 %452
    %v454 = vsel %vm57, %v403, 0.0
    %455 = vadd.xlane.f32.xlu0 %v454
    %v456 = vpop.xlane.xlu0 %455
    %v457 = vsel %vm57, %v405, 0.0
    %458 = vadd.xlane.f32.xlu0 %v457
    %v459 = vpop.xlane.xlu0 %458
    %v460 = vsel %vm57, %v407, 0.0
    %461 = vadd.xlane.f32.xlu0 %v460
    %v462 = vpop.xlane.xlu0 %461
    %v463 = vsel %vm57, %v409, 0.0
    %464 = vadd.xlane.f32.xlu0 %v463
    %v465 = vpop.xlane.xlu0 %464
    %v466 = vsel %vm57, %v411, 0.0
    %467 = vadd.xlane.f32.xlu0 %v466
    %v468 = vpop.xlane.xlu0 %467
    %v469 = vsel %vm57, %v413, 0.0
    %470 = vadd.xlane.f32.xlu0 %v469
    %v471 = vpop.xlane.xlu0 %470
    %v472 = vsel %vm57, %v415, 0.0
    %473 = vadd.xlane.f32.xlu0 %v472
    %v474 = vpop.xlane.xlu0 %473
    %v475 = vsel %vm57, %v417, 0.0
    %476 = vadd.xlane.f32.xlu0 %v475
    %v477 = vpop.xlane.xlu0 %476
    %v478 = vsel %vm57, %v419, 0.0
    %479 = vadd.xlane.f32.xlu0 %v478
    %v480 = vpop.xlane.xlu0 %479
    %v481 = vsel %vm57, %v421, 0.0
    %482 = vadd.xlane.f32.xlu0 %v481
    %v483 = vpop.xlane.xlu0 %482
    %v484 = vsel %vm57, %v423, 0.0
    %485 = vadd.xlane.f32.xlu0 %v484
    %v486 = vpop.xlane.xlu0 %485
    %v487 = vsel %vm57, %v425, 0.0
    %488 = vadd.xlane.f32.xlu0 %v487
    %v489 = vpop.xlane.xlu0 %488
    %v490 = vadd.f32 %v314, %v444
    %v491 = vadd.f32 %v315, %v447
    %v492 = vadd.f32 %v316, %v450
    %v493 = vadd.f32 %v317, %v453
    %v494 = vadd.f32 %v318, %v456
    %v495 = vadd.f32 %v319, %v459
    %v496 = vadd.f32 %v320, %v462
    %v497 = vadd.f32 %v321, %v465
    %v498 = vadd.f32 %v322, %v468
    %v499 = vadd.f32 %v323, %v471
    %v500 = vadd.f32 %v324, %v474
    %v501 = vadd.f32 %v325, %v477
    %v502 = vadd.f32 %v326, %v480
    %v503 = vadd.f32 %v327, %v483
    %v504 = vadd.f32 %v328, %v486
    %v505 = vadd.f32 %v329, %v489
    %506 = vrot.lane.b32.xlu0 %v9, 32
    %v507 = vpop.permute.xlu0 %506
    %508 = vrot.lane.b32.xlu0 %v10, 32
    %v509 = vpop.permute.xlu0 %508
    %510 = vrot.lane.b32.xlu0 %v11, 32
    %v511 = vpop.permute.xlu0 %510
    %512 = vrot.lane.b32.xlu0 %v12, 32
    %v513 = vpop.permute.xlu0 %512
    %514 = vrot.lane.b32.xlu0 %v13, 32
    %v515 = vpop.permute.xlu0 %514
    %516 = vrot.lane.b32.xlu0 %v14, 32
    %v517 = vpop.permute.xlu0 %516
    %518 = vrot.lane.b32.xlu0 %v15, 32
    %v519 = vpop.permute.xlu0 %518
    %520 = vrot.lane.b32.xlu0 %v16, 32
    %v521 = vpop.permute.xlu0 %520
    %522 = vrot.lane.b32.xlu0 %v17, 32
    %v523 = vpop.permute.xlu0 %522
    %524 = vrot.lane.b32.xlu0 %v18, 32
    %v525 = vpop.permute.xlu0 %524
    %526 = vrot.lane.b32.xlu0 %v19, 32
    %v527 = vpop.permute.xlu0 %526
    %528 = vrot.lane.b32.xlu0 %v20, 32
    %v529 = vpop.permute.xlu0 %528
    %530 = vrot.lane.b32.xlu0 %v21, 32
    %v531 = vpop.permute.xlu0 %530
    %532 = vrot.lane.b32.xlu0 %v22, 32
    %v533 = vpop.permute.xlu0 %532
    %534 = vrot.lane.b32.xlu0 %v23, 32
    %v535 = vpop.permute.xlu0 %534
    %536 = vrot.lane.b32.xlu0 %v24, 32
    %v537 = vpop.permute.xlu0 %536
    %v554 = vadd.f32 %v378, %v507
    %v555 = vadd.f32 %v379, %v509
    %v556 = vadd.f32 %v380, %v511
    %v557 = vadd.f32 %v381, %v513
    %v558 = vadd.f32 %v382, %v515
    %v559 = vadd.f32 %v383, %v517
    %v560 = vadd.f32 %v384, %v519
    %v561 = vadd.f32 %v385, %v521
    %v562 = vadd.f32 %v386, %v523
    %v563 = vadd.f32 %v387, %v525
    %v564 = vadd.f32 %v388, %v527
    %v565 = vadd.f32 %v389, %v529
    %v566 = vadd.f32 %v390, %v531
    %v567 = vadd.f32 %v391, %v533
    %v568 = vadd.f32 %v392, %v535
    %v569 = vadd.f32 %v393, %v537
    %570 = vrot.lane.b32.xlu0 %v41, 32
    %v571 = vpop.permute.xlu0 %570
    %572 = vrot.lane.b32.xlu0 %v42, 32
    %v573 = vpop.permute.xlu0 %572
    %574 = vrot.lane.b32.xlu0 %v43, 32
    %v575 = vpop.permute.xlu0 %574
    %576 = vrot.lane.b32.xlu0 %v44, 32
    %v577 = vpop.permute.xlu0 %576
    %578 = vrot.lane.b32.xlu0 %v45, 32
    %v579 = vpop.permute.xlu0 %578
    %580 = vrot.lane.b32.xlu0 %v46, 32
    %v581 = vpop.permute.xlu0 %580
    %582 = vrot.lane.b32.xlu0 %v47, 32
    %v583 = vpop.permute.xlu0 %582
    %584 = vrot.lane.b32.xlu0 %v48, 32
    %v585 = vpop.permute.xlu0 %584
    %586 = vrot.lane.b32.xlu0 %v49, 32
    %v587 = vpop.permute.xlu0 %586
    %588 = vrot.lane.b32.xlu0 %v50, 32
    %v589 = vpop.permute.xlu0 %588
    %590 = vrot.lane.b32.xlu0 %v51, 32
    %v591 = vpop.permute.xlu0 %590
    %592 = vrot.lane.b32.xlu0 %v52, 32
    %v593 = vpop.permute.xlu0 %592
    %594 = vrot.lane.b32.xlu0 %v53, 32
    %v595 = vpop.permute.xlu0 %594
    %596 = vrot.lane.b32.xlu0 %v54, 32
    %v597 = vpop.permute.xlu0 %596
    %598 = vrot.lane.b32.xlu0 %v55, 32
    %v599 = vpop.permute.xlu0 %598
    %600 = vrot.lane.b32.xlu0 %v56, 32
    %v601 = vpop.permute.xlu0 %600
    %v618 = vsel %vm57, %v571, 0.0
    %619 = vadd.xlane.f32.xlu0 %v618
    %v620 = vpop.xlane.xlu0 %619
    %v621 = vsel %vm57, %v573, 0.0
    %622 = vadd.xlane.f32.xlu0 %v621
    %v623 = vpop.xlane.xlu0 %622
    %v624 = vsel %vm57, %v575, 0.0
    %625 = vadd.xlane.f32.xlu0 %v624
    %v626 = vpop.xlane.xlu0 %625
    %v627 = vsel %vm57, %v577, 0.0
    %628 = vadd.xlane.f32.xlu0 %v627
    %v629 = vpop.xlane.xlu0 %628
    %v630 = vsel %vm57, %v579, 0.0
    %631 = vadd.xlane.f32.xlu0 %v630
    %v632 = vpop.xlane.xlu0 %631
    %v633 = vsel %vm57, %v581, 0.0
    %634 = vadd.xlane.f32.xlu0 %v633
    %v635 = vpop.xlane.xlu0 %634
    %v636 = vsel %vm57, %v583, 0.0
    %637 = vadd.xlane.f32.xlu0 %v636
    %v638 = vpop.xlane.xlu0 %637
    %v639 = vsel %vm57, %v585, 0.0
    %640 = vadd.xlane.f32.xlu0 %v639
    %v641 = vpop.xlane.xlu0 %640
    %v642 = vsel %vm57, %v587, 0.0
    %643 = vadd.xlane.f32.xlu0 %v642
    %v644 = vpop.xlane.xlu0 %643
    %v645 = vsel %vm57, %v589, 0.0
    %646 = vadd.xlane.f32.xlu0 %v645
    %v647 = vpop.xlane.xlu0 %646
    %v648 = vsel %vm57, %v591, 0.0
    %649 = vadd.xlane.f32.xlu0 %v648
    %v650 = vpop.xlane.xlu0 %649
    %v651 = vsel %vm57, %v593, 0.0
    %652 = vadd.xlane.f32.xlu0 %v651
    %v653 = vpop.xlane.xlu0 %652
    %v654 = vsel %vm57, %v595, 0.0
    %655 = vadd.xlane.f32.xlu0 %v654
    %v656 = vpop.xlane.xlu0 %655
    %v657 = vsel %vm57, %v597, 0.0
    %658 = vadd.xlane.f32.xlu0 %v657
    %v659 = vpop.xlane.xlu0 %658
    %v660 = vsel %vm57, %v599, 0.0
    %661 = vadd.xlane.f32.xlu0 %v660
    %v662 = vpop.xlane.xlu0 %661
    %v663 = vsel %vm57, %v601, 0.0
    %664 = vadd.xlane.f32.xlu0 %v663
    %v665 = vpop.xlane.xlu0 %664
    %v666 = vadd.f32 %v490, %v620
    %v667 = vadd.f32 %v491, %v623
    %v668 = vadd.f32 %v492, %v626
    %v669 = vadd.f32 %v493, %v629
    %v670 = vadd.f32 %v494, %v632
    %v671 = vadd.f32 %v495, %v635
    %v672 = vadd.f32 %v496, %v638
    %v673 = vadd.f32 %v497, %v641
    %v674 = vadd.f32 %v498, %v644
    %v675 = vadd.f32 %v499, %v647
    %v676 = vadd.f32 %v500, %v650
    %v677 = vadd.f32 %v501, %v653
    %v678 = vadd.f32 %v502, %v656
    %v679 = vadd.f32 %v503, %v659
    %v680 = vadd.f32 %v504, %v662
    %v681 = vadd.f32 %v505, %v665
    %v682 = vmul.f32 %v554, %v554
    %v683 = vmul.f32 %v555, %v555
    %v684 = vmul.f32 %v556, %v556
    %v685 = vmul.f32 %v557, %v557
    %v686 = vmul.f32 %v558, %v558
    %v687 = vmul.f32 %v559, %v559
    %v688 = vmul.f32 %v560, %v560
    %v689 = vmul.f32 %v561, %v561
    %v690 = vmul.f32 %v562, %v562
    %v691 = vmul.f32 %v563, %v563
    %v692 = vmul.f32 %v564, %v564
    %v693 = vmul.f32 %v565, %v565
    %v694 = vmul.f32 %v566, %v566
    %v695 = vmul.f32 %v567, %v567
    %v696 = vmul.f32 %v568, %v568
    %v697 = vmul.f32 %v569, %v569
    %v698 = vsel %vm57, %v682, 0.0
    %699 = vadd.xlane.f32.xlu0 %v698
    %v700 = vpop.xlane.xlu0 %699
    %v701 = vsel %vm57, %v683, 0.0
    %702 = vadd.xlane.f32.xlu0 %v701
    %v703 = vpop.xlane.xlu0 %702
    %v704 = vsel %vm57, %v684, 0.0
    %705 = vadd.xlane.f32.xlu0 %v704
    %v706 = vpop.xlane.xlu0 %705
    %v707 = vsel %vm57, %v685, 0.0
    %708 = vadd.xlane.f32.xlu0 %v707
    %v709 = vpop.xlane.xlu0 %708
    %v710 = vsel %vm57, %v686, 0.0
    %711 = vadd.xlane.f32.xlu0 %v710
    %v712 = vpop.xlane.xlu0 %711
    %v713 = vsel %vm57, %v687, 0.0
    %714 = vadd.xlane.f32.xlu0 %v713
    %v715 = vpop.xlane.xlu0 %714
    %v716 = vsel %vm57, %v688, 0.0
    %717 = vadd.xlane.f32.xlu0 %v716
    %v718 = vpop.xlane.xlu0 %717
    %v719 = vsel %vm57, %v689, 0.0
    %720 = vadd.xlane.f32.xlu0 %v719
    %v721 = vpop.xlane.xlu0 %720
    %v722 = vsel %vm57, %v690, 0.0
    %723 = vadd.xlane.f32.xlu0 %v722
    %v724 = vpop.xlane.xlu0 %723
    %v725 = vsel %vm57, %v691, 0.0
    %726 = vadd.xlane.f32.xlu0 %v725
    %v727 = vpop.xlane.xlu0 %726
    %v728 = vsel %vm57, %v692, 0.0
    %729 = vadd.xlane.f32.xlu0 %v728
    %v730 = vpop.xlane.xlu0 %729
    %v731 = vsel %vm57, %v693, 0.0
    %732 = vadd.xlane.f32.xlu0 %v731
    %v733 = vpop.xlane.xlu0 %732
    %v734 = vsel %vm57, %v694, 0.0
    %735 = vadd.xlane.f32.xlu0 %v734
    %v736 = vpop.xlane.xlu0 %735
    %v737 = vsel %vm57, %v695, 0.0
    %738 = vadd.xlane.f32.xlu0 %v737
    %v739 = vpop.xlane.xlu0 %738
    %v740 = vsel %vm57, %v696, 0.0
    %741 = vadd.xlane.f32.xlu0 %v740
    %v742 = vpop.xlane.xlu0 %741
    %v743 = vsel %vm57, %v697, 0.0
    %744 = vadd.xlane.f32.xlu0 %v743
    %v745 = vpop.xlane.xlu0 %744
    %v746 = vsub.f32 %v700, %v666
    %v747 = vsub.f32 %v703, %v667
    %v748 = vsub.f32 %v706, %v668
    %v749 = vsub.f32 %v709, %v669
    %v750 = vsub.f32 %v712, %v670
    %v751 = vsub.f32 %v715, %v671
    %v752 = vsub.f32 %v718, %v672
    %v753 = vsub.f32 %v721, %v673
    %v754 = vsub.f32 %v724, %v674
    %v755 = vsub.f32 %v727, %v675
    %v756 = vsub.f32 %v730, %v676
    %v757 = vsub.f32 %v733, %v677
    %v758 = vsub.f32 %v736, %v678
    %v759 = vsub.f32 %v739, %v679
    %v760 = vsub.f32 %v742, %v680
    %v761 = vsub.f32 %v745, %v681
    %v762 = vmul.f32 %v746, 0.5
    %v763 = vmul.f32 %v747, 0.5
    %v764 = vmul.f32 %v748, 0.5
    %v765 = vmul.f32 %v749, 0.5
    %v766 = vmul.f32 %v750, 0.5
    %v767 = vmul.f32 %v751, 0.5
    %v768 = vmul.f32 %v752, 0.5
    %v769 = vmul.f32 %v753, 0.5
    %v770 = vmul.f32 %v754, 0.5
    %v771 = vmul.f32 %v755, 0.5
    %v772 = vmul.f32 %v756, 0.5
    %v773 = vmul.f32 %v757, 0.5
    %v774 = vmul.f32 %v758, 0.5
    %v775 = vmul.f32 %v759, 0.5
    %v776 = vmul.f32 %v760, 0.5
    %v777 = vmul.f32 %v761, 0.5
    %v794 = vlaneseq
    %v795 = vand.u32 %v794, 127
    %v796 = vlaneseq
    %v797 = vshrl.u32 %v796, 7
    %v798 = vsub.s32 %v795, %v797
    %v799 = vrot.slane %v762, %v798
    %v800 = vadd.s32 %v795, 4294967288
    %v801 = vlaneseq
    %v802 = vshrl.u32 %v801, 7
    %v803 = vsub.s32 %v800, %v802
    %v804 = vrot.slane %v763, %v803
    %vm805 = vcmask 130112
    %v806 = vsel %vm805, %v804, %v799
    %v807 = vadd.s32 %v795, 4294967280
    %v808 = vlaneseq
    %v809 = vshrl.u32 %v808, 7
    %v810 = vsub.s32 %v807, %v809
    %v811 = vrot.slane %v764, %v810
    %vm812 = vcmask 195712
    %v813 = vsel %vm812, %v811, %v806
    %v814 = vadd.s32 %v795, 4294967272
    %v815 = vlaneseq
    %v816 = vshrl.u32 %v815, 7
    %v817 = vsub.s32 %v814, %v816
    %v818 = vrot.slane %v765, %v817
    %vm819 = vcmask 261312
    %v820 = vsel %vm819, %v818, %v813
    %v821 = vadd.s32 %v795, 4294967264
    %v822 = vlaneseq
    %v823 = vshrl.u32 %v822, 7
    %v824 = vsub.s32 %v821, %v823
    %v825 = vrot.slane %v766, %v824
    %vm826 = vcmask 326912
    %v827 = vsel %vm826, %v825, %v820
    %v828 = vadd.s32 %v795, 4294967256
    %v829 = vlaneseq
    %v830 = vshrl.u32 %v829, 7
    %v831 = vsub.s32 %v828, %v830
    %v832 = vrot.slane %v767, %v831
    %vm833 = vcmask 392512
    %v834 = vsel %vm833, %v832, %v827
    %v835 = vadd.s32 %v795, 4294967248
    %v836 = vlaneseq
    %v837 = vshrl.u32 %v836, 7
    %v838 = vsub.s32 %v835, %v837
    %v839 = vrot.slane %v768, %v838
    %vm840 = vcmask 458112
    %v841 = vsel %vm840, %v839, %v834
    %v842 = vadd.s32 %v795, 4294967240
    %v843 = vlaneseq
    %v844 = vshrl.u32 %v843, 7
    %v845 = vsub.s32 %v842, %v844
    %v846 = vrot.slane %v769, %v845
    %vm847 = vcmask 523712
    %v848 = vsel %vm847, %v846, %v841
    %v849 = vadd.s32 %v795, 4294967232
    %v850 = vlaneseq
    %v851 = vshrl.u32 %v850, 7
    %v852 = vsub.s32 %v849, %v851
    %v853 = vrot.slane %v770, %v852
    %vm854 = vcmask 589312
    %v855 = vsel %vm854, %v853, %v848
    %v856 = vadd.s32 %v795, 4294967224
    %v857 = vlaneseq
    %v858 = vshrl.u32 %v857, 7
    %v859 = vsub.s32 %v856, %v858
    %v860 = vrot.slane %v771, %v859
    %vm861 = vcmask 654912
    %v862 = vsel %vm861, %v860, %v855
    %v863 = vadd.s32 %v795, 4294967216
    %v864 = vlaneseq
    %v865 = vshrl.u32 %v864, 7
    %v866 = vsub.s32 %v863, %v865
    %v867 = vrot.slane %v772, %v866
    %vm868 = vcmask 720512
    %v869 = vsel %vm868, %v867, %v862
    %v870 = vadd.s32 %v795, 4294967208
    %v871 = vlaneseq
    %v872 = vshrl.u32 %v871, 7
    %v873 = vsub.s32 %v870, %v872
    %v874 = vrot.slane %v773, %v873
    %vm875 = vcmask 786112
    %v876 = vsel %vm875, %v874, %v869
    %v877 = vadd.s32 %v795, 4294967200
    %v878 = vlaneseq
    %v879 = vshrl.u32 %v878, 7
    %v880 = vsub.s32 %v877, %v879
    %v881 = vrot.slane %v774, %v880
    %vm882 = vcmask 851712
    %v883 = vsel %vm882, %v881, %v876
    %v884 = vadd.s32 %v795, 4294967192
    %v885 = vlaneseq
    %v886 = vshrl.u32 %v885, 7
    %v887 = vsub.s32 %v884, %v886
    %v888 = vrot.slane %v775, %v887
    %vm889 = vcmask 917312
    %v890 = vsel %vm889, %v888, %v883
    %v891 = vadd.s32 %v795, 4294967184
    %v892 = vlaneseq
    %v893 = vshrl.u32 %v892, 7
    %v894 = vsub.s32 %v891, %v893
    %v895 = vrot.slane %v776, %v894
    %vm896 = vcmask 982912
    %v897 = vsel %vm896, %v895, %v890
    %v898 = vadd.s32 %v795, 4294967176
    %v899 = vlaneseq
    %v900 = vshrl.u32 %v899, 7
    %v901 = vsub.s32 %v898, %v900
    %v902 = vrot.slane %v777, %v901
    %vm903 = vcmask 1048512
    %v904 = vsel %vm903, %v902, %v897
    %906 = vst [vmem:[#allocation2] sm:$0x1] %v904
    // Predicated region
    $region6: #{factorization_machine.1} parent=1 // pred_check
      _
    $region7: #{factorization_machine.1} parent=1 // pred_check_branch
      %908 = sbr.rel (0) target = $region9
    $region8: #{factorization_machine.1} parent=1 // pred_region
      %s910 = ssub.s32 16, 16
      %911 = vsyncadd [#allocation3], %s910
      %s913 = sshll.u32 [#allocation2], 4
      %s914 = int_to_ptr.vmem [resolvable:$true] %s913
      %916 = dma.vmem_to_hbm [thread:$0]  %s914, 16, %s1, [#allocation3]
    $region9: #{factorization_machine.1} parent=1 // pred_fallthru
      _
    // Predicated region
    $region10: #{factorization_machine.1} parent=1 // pred_check
      _
    $region11: #{factorization_machine.1} parent=1 // pred_check_branch
      %918 = sbr.rel (0) target = $region13
    $region12: #{factorization_machine.1} parent=1 // pred_region
      %919 = dma.done [#allocation3], 16
    $region13: #{factorization_machine.1} parent=1 // pred_fallthru
      _
    %920 = vsyncpa [#allocation3], 1

</llo_original>
